<compile_context>
chip_gen: v6e
topology: v6e:2x2x1
jax: 0.10.0
libtpu: 0.0.40
codegen_flags: <defaults>
</compile_context>

<pallas_src>
import functools

import jax
import jax.numpy as jnp
from jax import lax
from jax.experimental import pallas as pl
from jax.experimental.pallas import tpu as pltpu

LANE = 128  # lanes per vreg; batch chunk processed per inner-loop step


def valuenet_kernel(xt_ref, w1_ref, b1r_ref, w2r_ref, b2_ref, o_ref, *, fc1_on_mxu):
    """One batch tile of the ValueNet forward.

    xt_ref:  (state_dim, TILE_B) f32, batch on lanes
    w1_ref:  VPU path: (state_dim, hidden, LANE) lane-replicated fc1 weight
             MXU path: (hidden, state_dim)
    b1r_ref: (hidden, LANE) lane-replicated fc1 bias
    w2r_ref: (hidden, LANE) lane-replicated fc2 weight
    b2_ref:  (1,) scalar in SMEM
    o_ref:   (1, TILE_B) lane-dense output row
    """
    state_dim = xt_ref.shape[0]
    hidden = b1r_ref.shape[0]
    tile_b = xt_ref.shape[1]
    n_chunks = tile_b // LANE          # static
    b2 = b2_ref[0]

    def chunk_body(c, carry):
        lo = pl.multiple_of(c * LANE, LANE)
        xc = xt_ref[:, pl.ds(lo, LANE)]                      # (state_dim, LANE)

        if fc1_on_mxu:
            # TODO(synk): benchmark variant; K=state_dim=4 underfills the MXU,
            # by a vmatmul-cadence estimate it is not obviously faster than VPU.
            h = jnp.dot(w1_ref[...], xc,
                        preferred_element_type=jnp.float32) + b1r_ref[...]
        else:
            # fc1 as K=4 statically-unrolled VPU FMAs.  w1/b1 are pre-replicated
            # across lanes (no XLU lane broadcast); the x-row broadcast is along
            # sublanes (cheap).
            h = b1r_ref[...]                                 # (hidden, LANE)
            for k in range(state_dim):                       # static unroll, K=4
                h = h + w1_ref[k] * xc[k:k + 1, :]
        h = jnp.maximum(h, 0.0)                              # ReLU (VPU)

        # fc2 (N=1): elementwise multiply then reduce over hidden (sublanes).
        hw = h * w2r_ref[...]                                # (hidden, LANE)
        if hidden % 8 == 0 and hidden > 8:
            # Explicit cross-vreg adds (VPU) + single intra-vreg sublane reduce.
            acc = hw[0:8, :]
            for s in range(8, hidden, 8):                    # static unroll
                acc = acc + hw[s:s + 8, :]
            v = jnp.sum(acc, axis=0, keepdims=True) + b2     # (1, LANE)
        else:
            v = jnp.sum(hw, axis=0, keepdims=True) + b2
        o_ref[:, pl.ds(lo, LANE)] = v
        return carry

    # fori_loop (not a Python for) bounds the live vreg set to one 128-lane chunk.
    lax.fori_loop(0, n_chunks, chunk_body, 0)


def value_net_forward_t(xt, w1, b1, w2, b2, *, tile_b=4096, fc1_on_mxu=False):
    """Forward pass with x already transposed: xt is (state_dim, B) f32.

    Weights stored (in, out): w1 (state_dim, hidden), b1 (1, hidden) or (hidden,),
    w2 (hidden, 1), b2 (1, 1) or scalar.  Returns (B, 1) f32.
    """
    state_dim, B = xt.shape
    hidden = w1.shape[1]

    # Tile plan: big tiles amortize the ~0.35 us per-grid-step overhead, but keep
    # >= 2 grid steps whenever B spans >= 2 lane-groups so both v7x TCs get work.
    b_units = pl.cdiv(B, LANE)
    tile_units = max(1, min(tile_b // LANE, pl.cdiv(b_units, 2)))
    num_tiles = pl.cdiv(b_units, tile_units)
    tile_b = tile_units * LANE
    b_pad = num_tiles * tile_b

    if b_pad != B:
        xt = jnp.pad(xt, ((0, 0), (0, b_pad - B)))

    # Parameter layout plumbing (pinned VMEM, <= ~400 KiB total).  Lane-replicate
    # the (hidden,)-shaped operands so the kernel never lane-broadcasts.
    b1r = jnp.broadcast_to(b1.reshape(hidden, 1), (hidden, LANE))
    w2r = jnp.broadcast_to(w2.reshape(hidden, 1), (hidden, LANE))
    b2s = b2.reshape(1)

    if fc1_on_mxu:
        w1_arr = jnp.transpose(w1)                                   # (hidden, state_dim)
        w1_spec = pl.BlockSpec((hidden, state_dim), lambda i: (0, 0))
    else:
        w1_arr = jnp.broadcast_to(w1[:, :, None], (state_dim, hidden, LANE))
        w1_spec = pl.BlockSpec((state_dim, hidden, LANE), lambda i: (0, 0, 0))

    out = pl.pallas_call(
        functools.partial(valuenet_kernel, fc1_on_mxu=fc1_on_mxu),
        out_shape=jax.ShapeDtypeStruct((1, b_pad), jnp.float32),
        grid=(num_tiles,),
        in_specs=[
            pl.BlockSpec((state_dim, tile_b), lambda i: (0, i)),   # x tile (pipelined)
            w1_spec,                                               # w1 pinned
            pl.BlockSpec((hidden, LANE), lambda i: (0, 0)),        # b1 pinned
            pl.BlockSpec((hidden, LANE), lambda i: (0, 0)),        # w2 pinned
            pl.BlockSpec(memory_space=pltpu.MemorySpace.SMEM),     # b2 scalar
        ],
        out_specs=pl.BlockSpec((1, tile_b), lambda i: (0, i)),     # lane-dense row
        compiler_params=pltpu.CompilerParams(
            dimension_semantics=("parallel",)),
    )(xt, w1_arr, b1r, w2r, b2s)

    return out.reshape(b_pad, 1)[:B]


def value_net_forward(x, w1, b1, w2, b2, **kw):
    """x: (B, state_dim) f32 -> (B, 1) f32 (matches the PyTorch module)."""
    # TODO(synk): extra HBM pass; produce x as (state_dim, B) upstream when possible.
    return value_net_forward_t(x.T, w1, b1, w2, b2, **kw)


def init_params(key, state_dim, hidden_dim):
    """Deterministic PyTorch-Linear-style init: U(-1/sqrt(fan_in), 1/sqrt(fan_in))."""
    k1, k2, k3, k4 = jax.random.split(key, 4)
    bound1 = 1.0 / jnp.sqrt(state_dim)
    bound2 = 1.0 / jnp.sqrt(hidden_dim)
    w1 = jax.random.uniform(k1, (state_dim, hidden_dim), jnp.float32, -bound1, bound1)
    b1 = jax.random.uniform(k2, (1, hidden_dim), jnp.float32, -bound1, bound1)
    w2 = jax.random.uniform(k3, (hidden_dim, 1), jnp.float32, -bound2, bound2)
    b2 = jax.random.uniform(k4, (1, 1), jnp.float32, -bound2, bound2)
    return w1, b1, w2, b2


if __name__ == "__main__":
    # CartPole-v0: state_dim = 4; hidden_dim = 128 (module globals); small batch.
    state_dim, hidden_dim, batch = 4, 128, 8

    key = jax.random.PRNGKey(0)
    kx, kp = jax.random.split(key)
    x = jax.random.normal(kx, (batch, state_dim), dtype=jnp.float32)
    w1, b1, w2, b2 = init_params(kp, state_dim, hidden_dim)

    out = jax.block_until_ready(value_net_forward(x, w1, b1, w2, b2))

    # Pure-JAX reference (same semantics as the PyTorch forward).
    ref = jnp.maximum(x @ w1 + b1, 0.0) @ w2 + b2
    assert out.shape == (batch, 1)
    assert jnp.allclose(out, ref, atol=1e-5, rtol=1e-5)

    # Multi-tile batch: exercises the "parallel" grid axis and the in-kernel
    # 128-lane chunk loop (2 tiles x 4 chunks at this size).
    big_b = 1000
    xb = jax.random.normal(kx, (big_b, state_dim), dtype=jnp.float32)
    out_b = jax.block_until_ready(value_net_forward(xb, w1, b1, w2, b2))
    ref_b = jnp.maximum(xb @ w1 + b1, 0.0) @ w2 + b2
    assert out_b.shape == (big_b, 1)
    assert jnp.allclose(out_b, ref_b, atol=1e-4, rtol=1e-4)

    print("KERNEL_OK")
</pallas_src>

<mosaic_0001>
module attributes {stable_mosaic.version = 11 : i64} {
  func.func @valuenet_kernel(%arg0: i32, %arg1: memref<4x128xf32, #tpu.memory_space<vmem>>, %arg2: memref<4x128x128xf32, #tpu.memory_space<vmem>>, %arg3: memref<128x128xf32, #tpu.memory_space<vmem>>, %arg4: memref<128x128xf32, #tpu.memory_space<vmem>>, %arg5: memref<1xf32, #tpu.memory_space<smem>>, %arg6: memref<1x128xf32, #tpu.memory_space<vmem>>) attributes {dimension_semantics = [#tpu.dimension_semantics<parallel>], iteration_bounds = array<i64: 1>, scalar_prefetch = 0 : i64, scratch_operands = 0 : i64, tpu.core_type = #tpu.core_type<tc>, window_params = [{transform_indices = @transform_0, window_bounds = array<i64: 4, 128>}, {pipeline_mode = #tpu.pipeline_mode<synchronous>, transform_indices = @transform_1, window_bounds = array<i64: 4, 128, 128>}, {pipeline_mode = #tpu.pipeline_mode<synchronous>, transform_indices = @transform_2, window_bounds = array<i64: 128, 128>}, {pipeline_mode = #tpu.pipeline_mode<synchronous>, transform_indices = @transform_3, window_bounds = array<i64: 128, 128>}, {transform_indices = @transform_4, window_bounds = array<i64: 1>}, {transform_indices = @transform_5, window_bounds = array<i64: 1, 128>}]} {
    %c0 = arith.constant 0 : index
    %0 = memref.load %arg5[%c0] : memref<1xf32, #tpu.memory_space<smem>>
    %c0_i32 = arith.constant 0 : i32
    %c128_i32 = arith.constant 128 : i32
    %1 = arith.muli %c0_i32, %c128_i32 : i32
    %2 = tpu.assume_multiple %1, 128 : i32
    %c0_0 = arith.constant 0 : index
    %3 = arith.index_cast %2 : i32 to index
    %4 = vector.load %arg1[%c0_0, %3] : memref<4x128xf32, #tpu.memory_space<vmem>>, vector<4x128xf32>
    %c0_1 = arith.constant 0 : index
    %c0_2 = arith.constant 0 : index
    %5 = vector.load %arg3[%c0_1, %c0_2] : memref<128x128xf32, #tpu.memory_space<vmem>>, vector<128x128xf32>
    %c0_3 = arith.constant 0 : index
    %c0_4 = arith.constant 0 : index
    %c0_5 = arith.constant 0 : index
    %6 = vector.load %arg2[%c0_3, %c0_4, %c0_5] : memref<4x128x128xf32, #tpu.memory_space<vmem>>, vector<1x128x128xf32>
    %7 = vector.shape_cast %6 : vector<1x128x128xf32> to vector<128x128xf32>
    %8 = vector.extract_strided_slice %4 {offsets = [0, 0], sizes = [1, 128], strides = [1, 1]} : vector<4x128xf32> to vector<1x128xf32>
    %9 = vector.broadcast %8 : vector<1x128xf32> to vector<128x128xf32>
    %10 = arith.mulf %7, %9 : vector<128x128xf32>
    %11 = arith.addf %5, %10 : vector<128x128xf32>
    %c1 = arith.constant 1 : index
    %c0_6 = arith.constant 0 : index
    %c0_7 = arith.constant 0 : index
    %12 = vector.load %arg2[%c1, %c0_6, %c0_7] : memref<4x128x128xf32, #tpu.memory_space<vmem>>, vector<1x128x128xf32>
    %13 = vector.shape_cast %12 : vector<1x128x128xf32> to vector<128x128xf32>
    %14 = vector.extract_strided_slice %4 {offsets = [1, 0], sizes = [1, 128], strides = [1, 1]} : vector<4x128xf32> to vector<1x128xf32>
    %15 = vector.broadcast %14 : vector<1x128xf32> to vector<128x128xf32>
    %16 = arith.mulf %13, %15 : vector<128x128xf32>
    %17 = arith.addf %11, %16 : vector<128x128xf32>
    %c2 = arith.constant 2 : index
    %c0_8 = arith.constant 0 : index
    %c0_9 = arith.constant 0 : index
    %18 = vector.load %arg2[%c2, %c0_8, %c0_9] : memref<4x128x128xf32, #tpu.memory_space<vmem>>, vector<1x128x128xf32>
    %19 = vector.shape_cast %18 : vector<1x128x128xf32> to vector<128x128xf32>
    %20 = vector.extract_strided_slice %4 {offsets = [2, 0], sizes = [1, 128], strides = [1, 1]} : vector<4x128xf32> to vector<1x128xf32>
    %21 = vector.broadcast %20 : vector<1x128xf32> to vector<128x128xf32>
    %22 = arith.mulf %19, %21 : vector<128x128xf32>
    %23 = arith.addf %17, %22 : vector<128x128xf32>
    %c3 = arith.constant 3 : index
    %c0_10 = arith.constant 0 : index
    %c0_11 = arith.constant 0 : index
    %24 = vector.load %arg2[%c3, %c0_10, %c0_11] : memref<4x128x128xf32, #tpu.memory_space<vmem>>, vector<1x128x128xf32>
    %25 = vector.shape_cast %24 : vector<1x128x128xf32> to vector<128x128xf32>
    %26 = vector.extract_strided_slice %4 {offsets = [3, 0], sizes = [1, 128], strides = [1, 1]} : vector<4x128xf32> to vector<1x128xf32>
    %27 = vector.broadcast %26 : vector<1x128xf32> to vector<128x128xf32>
    %28 = arith.mulf %25, %27 : vector<128x128xf32>
    %29 = arith.addf %23, %28 : vector<128x128xf32>
    %cst = arith.constant 0.000000e+00 : f32
    %30 = vector.broadcast %cst : f32 to vector<128x128xf32>
    %31 = arith.maximumf %29, %30 : vector<128x128xf32>
    %c0_12 = arith.constant 0 : index
    %c0_13 = arith.constant 0 : index
    %32 = vector.load %arg4[%c0_12, %c0_13] : memref<128x128xf32, #tpu.memory_space<vmem>>, vector<128x128xf32>
    %33 = arith.mulf %31, %32 : vector<128x128xf32>
    %34 = vector.extract_strided_slice %33 {offsets = [0, 0], sizes = [8, 128], strides = [1, 1]} : vector<128x128xf32> to vector<8x128xf32>
    %35 = vector.extract_strided_slice %33 {offsets = [8, 0], sizes = [8, 128], strides = [1, 1]} : vector<128x128xf32> to vector<8x128xf32>
    %36 = arith.addf %34, %35 : vector<8x128xf32>
    %37 = vector.extract_strided_slice %33 {offsets = [16, 0], sizes = [8, 128], strides = [1, 1]} : vector<128x128xf32> to vector<8x128xf32>
    %38 = arith.addf %36, %37 : vector<8x128xf32>
    %39 = vector.extract_strided_slice %33 {offsets = [24, 0], sizes = [8, 128], strides = [1, 1]} : vector<128x128xf32> to vector<8x128xf32>
    %40 = arith.addf %38, %39 : vector<8x128xf32>
    %41 = vector.extract_strided_slice %33 {offsets = [32, 0], sizes = [8, 128], strides = [1, 1]} : vector<128x128xf32> to vector<8x128xf32>
    %42 = arith.addf %40, %41 : vector<8x128xf32>
    %43 = vector.extract_strided_slice %33 {offsets = [40, 0], sizes = [8, 128], strides = [1, 1]} : vector<128x128xf32> to vector<8x128xf32>
    %44 = arith.addf %42, %43 : vector<8x128xf32>
    %45 = vector.extract_strided_slice %33 {offsets = [48, 0], sizes = [8, 128], strides = [1, 1]} : vector<128x128xf32> to vector<8x128xf32>
    %46 = arith.addf %44, %45 : vector<8x128xf32>
    %47 = vector.extract_strided_slice %33 {offsets = [56, 0], sizes = [8, 128], strides = [1, 1]} : vector<128x128xf32> to vector<8x128xf32>
    %48 = arith.addf %46, %47 : vector<8x128xf32>
    %49 = vector.extract_strided_slice %33 {offsets = [64, 0], sizes = [8, 128], strides = [1, 1]} : vector<128x128xf32> to vector<8x128xf32>
    %50 = arith.addf %48, %49 : vector<8x128xf32>
    %51 = vector.extract_strided_slice %33 {offsets = [72, 0], sizes = [8, 128], strides = [1, 1]} : vector<128x128xf32> to vector<8x128xf32>
    %52 = arith.addf %50, %51 : vector<8x128xf32>
    %53 = vector.extract_strided_slice %33 {offsets = [80, 0], sizes = [8, 128], strides = [1, 1]} : vector<128x128xf32> to vector<8x128xf32>
    %54 = arith.addf %52, %53 : vector<8x128xf32>
    %55 = vector.extract_strided_slice %33 {offsets = [88, 0], sizes = [8, 128], strides = [1, 1]} : vector<128x128xf32> to vector<8x128xf32>
    %56 = arith.addf %54, %55 : vector<8x128xf32>
    %57 = vector.extract_strided_slice %33 {offsets = [96, 0], sizes = [8, 128], strides = [1, 1]} : vector<128x128xf32> to vector<8x128xf32>
    %58 = arith.addf %56, %57 : vector<8x128xf32>
    %59 = vector.extract_strided_slice %33 {offsets = [104, 0], sizes = [8, 128], strides = [1, 1]} : vector<128x128xf32> to vector<8x128xf32>
    %60 = arith.addf %58, %59 : vector<8x128xf32>
    %61 = vector.extract_strided_slice %33 {offsets = [112, 0], sizes = [8, 128], strides = [1, 1]} : vector<128x128xf32> to vector<8x128xf32>
    %62 = arith.addf %60, %61 : vector<8x128xf32>
    %63 = vector.extract_strided_slice %33 {offsets = [120, 0], sizes = [8, 128], strides = [1, 1]} : vector<128x128xf32> to vector<8x128xf32>
    %64 = arith.addf %62, %63 : vector<8x128xf32>
    %cst_14 = arith.constant dense<0.000000e+00> : vector<128xf32>
    %65 = vector.multi_reduction <add>, %64, %cst_14 [0] : vector<8x128xf32> to vector<128xf32>
    %66 = vector.shape_cast %65 : vector<128xf32> to vector<1x128xf32>
    %67 = vector.broadcast %0 : f32 to vector<1x128xf32>
    %68 = arith.addf %66, %67 : vector<1x128xf32>
    %c0_15 = arith.constant 0 : index
    %69 = arith.index_cast %2 : i32 to index
    %70 = vector.load %arg6[%c0_15, %69] : memref<1x128xf32, #tpu.memory_space<vmem>>, vector<1x128xf32>
    tpu.vector_store %arg6[%c0_15, %69], %68 {strides = array<i32>} : memref<1x128xf32, #tpu.memory_space<vmem>>, vector<1x128xf32>,
    %c1_i32 = arith.constant 1 : i32
    return
  }
  func.func @transform_0(%arg0: i32) -> (i32, i32) {
    %c0_i32 = arith.constant 0 : i32
    %c0_i32_0 = arith.constant 0 : i32
    return %c0_i32, %arg0 : i32, i32
  }
  func.func @transform_1(%arg0: i32) -> (i32, i32, i32) {
    %c0_i32 = arith.constant 0 : i32
    %c0_i32_0 = arith.constant 0 : i32
    %c0_i32_1 = arith.constant 0 : i32
    %c0_i32_2 = arith.constant 0 : i32
    return %c0_i32, %c0_i32_0, %c0_i32_1 : i32, i32, i32
  }
  func.func @transform_2(%arg0: i32) -> (i32, i32) {
    %c0_i32 = arith.constant 0 : i32
    %c0_i32_0 = arith.constant 0 : i32
    %c0_i32_1 = arith.constant 0 : i32
    return %c0_i32, %c0_i32_0 : i32, i32
  }
  func.func @transform_3(%arg0: i32) -> (i32, i32) {
    %c0_i32 = arith.constant 0 : i32
    %c0_i32_0 = arith.constant 0 : i32
    %c0_i32_1 = arith.constant 0 : i32
    return %c0_i32, %c0_i32_0 : i32, i32
  }
  func.func @transform_4(%arg0: i32) -> i32 {
    %c0_i32 = arith.constant 0 : i32
    %c0_i32_0 = arith.constant 0 : i32
    return %c0_i32 : i32
  }
  func.func @transform_5(%arg0: i32) -> (i32, i32) {
    %c0_i32 = arith.constant 0 : i32
    %c0_i32_0 = arith.constant 0 : i32
    return %c0_i32, %arg0 : i32, i32
  }
}

</mosaic_0001>

<llo_original>
// kernel: tpu_custom_call.1
$region0: #{tpu_custom_call.1}
  #allocation0 [shape = 'u32[]', space=smem, size = 0x4, offset = 0x4, fixed_abs, tag = 'smem constant byte address 0x4 - core index']
  #allocation1 [shape = 'u32[144,128]{1,0:T(1,128)}', space=vmem, size = 0x12000, scoped, tag = 'internal scratch']
  #allocation2 [shape = 'f32[1]{0:T(128)S(6)}', space=smem, size = 0x200, scoped, tag = 'scoped memory for tpu_custom_call.1']
  %s0 = inlined_call_operand.hbm [shape: f32[4,128], index: 0, kind: input, shape index: {}]
  %s1 = inlined_call_operand.hbm [shape: f32[4,128,128], index: 1, kind: input, shape index: {}]
  %s2 = inlined_call_operand.hbm [shape: f32[128,128], index: 2, kind: input, shape index: {}]
  %s3 = inlined_call_operand.hbm [shape: f32[128,128], index: 3, kind: input, shape index: {}]
  %s4 = inlined_call_operand.<no memory space> [shape: f32[1], index: 4, kind: input, shape index: {}]
  %s5 = inlined_call_operand.hbm [shape: f32[1,128], index: 5, kind: output, shape index: {}]
  %s6 = sld [smem:[#allocation0]]
  $region46: #{tpu_custom_call.1} parent=0
    _
  %s8 = ssub.s32 1, %s6
  %s9 = scalar_select 0, %s8, %s6
  %10 = sst [smem:[#allocation2]] %s4
  $region1: #{tpu_custom_call.1} parent=0
    #allocation3 [shape = 'u8[2048]{0}', space=vmem, size = 0x800, scoped, tag = 'input window, operand 0, single buffered']
    #allocation4 [shape = 's32[1]{0}', space=sflag, size = 0x4, scoped, tag = 'scoped memory for tpu_custom_call.1']
    #allocation5 [shape = 's32[1]{0}', space=sflag, size = 0x4, scoped, tag = 'scoped memory for tpu_custom_call.1']
    #allocation6 [shape = 'u8[262144]{0}', space=vmem, size = 0x40000, scoped, tag = 'input window, operand 1, single buffered']
    #allocation7 [shape = 's32[1]{0}', space=sflag, size = 0x4, scoped, tag = 'scoped memory for tpu_custom_call.1']
    #allocation8 [shape = 'u8[65536]{0}', space=vmem, size = 0x10000, scoped, tag = 'input window, operand 2, single buffered']
    #allocation9 [shape = 'u8[65536]{0}', space=vmem, size = 0x10000, scoped, tag = 'input window, operand 3, single buffered']
    #allocation10 [shape = 's32[1]{0}', space=sflag, size = 0x4, scoped, tag = 'scoped memory for tpu_custom_call.1']
    #allocation11 [shape = 'u8[512]{0}', space=vmem, size = 0x400, scoped, tag = 'output window, operand 0, single buffered']
    %11 = vsyncpa [#allocation4], 0
    %12 = vsyncpa [#allocation7], 0
    %13 = vsyncpa [#allocation10], 0
    %14 = vsyncpa [#allocation5], 0
    // Predicated region
    $region2: #{tpu_custom_call.1} parent=1 // pred_check
      _
    $region3: #{tpu_custom_call.1} parent=1 // pred_check_branch
      %16 = sbr.rel (0) target = $region5
    $region4: #{tpu_custom_call.1} parent=1 // pred_region
      %s18 = ssub.s32 64, 64
      %19 = vsyncadd [#allocation4], %s18
      %s21 = sshll.u32 [#allocation3], 4
      %s22 = int_to_ptr.vmem [resolvable:$true] %s21
      %24 = dma.hbm_to_vmem [thread:$0]  %s0, 64, %s22, [#allocation4]
    $region5: #{tpu_custom_call.1} parent=1 // pred_fallthru
      _
    // Predicated region
    $region6: #{tpu_custom_call.1} parent=1 // pred_check
      _
    $region7: #{tpu_custom_call.1} parent=1 // pred_check_branch
      %26 = sbr.rel (0) target = $region9
    $region8: #{tpu_custom_call.1} parent=1 // pred_region
      %s28 = ssub.s32 8192, 8192
      %29 = vsyncadd [#allocation7], %s28
      %s30 = sshll.u32 [#allocation6], 4
      %s31 = int_to_ptr.vmem [resolvable:$true] %s30
      %36 = dma.hbm_to_vmem [thread:$0]  %s1, 8192, %s31, [#allocation7], 128, 128, 8
    $region9: #{tpu_custom_call.1} parent=1 // pred_fallthru
      _
    // Predicated region
    $region10: #{tpu_custom_call.1} parent=1 // pred_check
      _
    $region11: #{tpu_custom_call.1} parent=1 // pred_check_branch
      %38 = sbr.rel (0) target = $region13
    $region12: #{tpu_custom_call.1} parent=1 // pred_region
      %s40 = ssub.s32 2048, 2048
      %41 = vsyncadd [#allocation7], %s40
      %s42 = sshll.u32 [#allocation8], 4
      %s43 = int_to_ptr.vmem [resolvable:$true] %s42
      %48 = dma.hbm_to_vmem [thread:$0]  %s2, 2048, %s43, [#allocation7], 128, 128, 8
    $region13: #{tpu_custom_call.1} parent=1 // pred_fallthru
      _
    // Predicated region
    $region14: #{tpu_custom_call.1} parent=1 // pred_check
      _
    $region15: #{tpu_custom_call.1} parent=1 // pred_check_branch
      %50 = sbr.rel (0) target = $region17
    $region16: #{tpu_custom_call.1} parent=1 // pred_region
      %s52 = ssub.s32 2048, 2048
      %53 = vsyncadd [#allocation10], %s52
      %s54 = sshll.u32 [#allocation9], 4
      %s55 = int_to_ptr.vmem [resolvable:$true] %s54
      %60 = dma.hbm_to_vmem [thread:$0]  %s3, 2048, %s55, [#allocation10], 128, 128, 8
    $region17: #{tpu_custom_call.1} parent=1 // pred_fallthru
      _
    // Predicated region
    $region18: #{tpu_custom_call.1} parent=1 // pred_check
      _
    $region19: #{tpu_custom_call.1} parent=1 // pred_check_branch
      %62 = sbr.rel (0) target = $region21
    $region20: #{tpu_custom_call.1} parent=1 // pred_region
      _
    $region21: #{tpu_custom_call.1} parent=1 // pred_fallthru
      _
    // Predicated region
    $region22: #{tpu_custom_call.1} parent=1 // pred_check
      _
    $region23: #{tpu_custom_call.1} parent=1 // pred_check_branch
      %64 = sbr.rel (0) target = $region25
    $region24: #{tpu_custom_call.1} parent=1 // pred_region
      %65 = dma.done [#allocation4], 64
    $region25: #{tpu_custom_call.1} parent=1 // pred_fallthru
      _
    // Predicated region
    $region26: #{tpu_custom_call.1} parent=1 // pred_check
      _
    $region27: #{tpu_custom_call.1} parent=1 // pred_check_branch
      %67 = sbr.rel (0) target = $region29
    $region28: #{tpu_custom_call.1} parent=1 // pred_region
      %68 = dma.done [#allocation7], 8192
    $region29: #{tpu_custom_call.1} parent=1 // pred_fallthru
      _
    // Predicated region
    $region30: #{tpu_custom_call.1} parent=1 // pred_check
      _
    $region31: #{tpu_custom_call.1} parent=1 // pred_check_branch
      %70 = sbr.rel (0) target = $region33
    $region32: #{tpu_custom_call.1} parent=1 // pred_region
      %71 = dma.done [#allocation7], 2048
    $region33: #{tpu_custom_call.1} parent=1 // pred_fallthru
      _
    // Predicated region
    $region34: #{tpu_custom_call.1} parent=1 // pred_check
      _
    $region35: #{tpu_custom_call.1} parent=1 // pred_check_branch
      %73 = sbr.rel (0) target = $region37
    $region36: #{tpu_custom_call.1} parent=1 // pred_region
      %74 = dma.done [#allocation10], 2048
    $region37: #{tpu_custom_call.1} parent=1 // pred_fallthru
      _
    %s75 = sld [smem:[#allocation2]]
    %v76 = vld [vmem:[#allocation3] sm:$0xf]
    %v77 = vld [vmem:[#allocation8] sm:$0xff]
    %v78 = vld [vmem:[#allocation8 + $0x8] sm:$0xff]
    %v79 = vld [vmem:[#allocation8 + $0x10] sm:$0xff]
    %v80 = vld [vmem:[#allocation8 + $0x18] sm:$0xff]
    %v81 = vld [vmem:[#allocation8 + $0x20] sm:$0xff]
    %v82 = vld [vmem:[#allocation8 + $0x28] sm:$0xff]
    %v83 = vld [vmem:[#allocation8 + $0x30] sm:$0xff]
    %v84 = vld [vmem:[#allocation8 + $0x38] sm:$0xff]
    %v85 = vld [vmem:[#allocation8 + $0x40] sm:$0xff]
    %v86 = vld [vmem:[#allocation8 + $0x48] sm:$0xff]
    %v87 = vld [vmem:[#allocation8 + $0x50] sm:$0xff]
    %v88 = vld [vmem:[#allocation8 + $0x58] sm:$0xff]
    %v89 = vld [vmem:[#allocation8 + $0x60] sm:$0xff]
    %v90 = vld [vmem:[#allocation8 + $0x68] sm:$0xff]
    %v91 = vld [vmem:[#allocation8 + $0x70] sm:$0xff]
    %v92 = vld [vmem:[#allocation8 + $0x78] sm:$0xff]
    %v93 = vld [vmem:[#allocation6] sm:$0xff]
    %v94 = vld [vmem:[#allocation6 + $0x8] sm:$0xff]
    %v95 = vld [vmem:[#allocation6 + $0x10] sm:$0xff]
    %v96 = vld [vmem:[#allocation6 + $0x18] sm:$0xff]
    %v97 = vld [vmem:[#allocation6 + $0x20] sm:$0xff]
    %v98 = vld [vmem:[#allocation6 + $0x28] sm:$0xff]
    %v99 = vld [vmem:[#allocation6 + $0x30] sm:$0xff]
    %v100 = vld [vmem:[#allocation6 + $0x38] sm:$0xff]
    %v101 = vld [vmem:[#allocation6 + $0x40] sm:$0xff]
    %v102 = vld [vmem:[#allocation6 + $0x48] sm:$0xff]
    %v103 = vld [vmem:[#allocation6 + $0x50] sm:$0xff]
    %v104 = vld [vmem:[#allocation6 + $0x58] sm:$0xff]
    %v105 = vld [vmem:[#allocation6 + $0x60] sm:$0xff]
    %v106 = vld [vmem:[#allocation6 + $0x68] sm:$0xff]
    %v107 = vld [vmem:[#allocation6 + $0x70] sm:$0xff]
    %v108 = vld [vmem:[#allocation6 + $0x78] sm:$0xff]
    %v109 = vlaneseq
    %v110 = vshrl.u32 %v109, 7
    %v111 = vsub.s32 0, %v110
    %v112 = vrot.slane %v76, %v111
    %v113 = vmul.f32 %v93, %v112
    %v114 = vmul.f32 %v94, %v112
    %v115 = vmul.f32 %v95, %v112
    %v116 = vmul.f32 %v96, %v112
    %v117 = vmul.f32 %v97, %v112
    %v118 = vmul.f32 %v98, %v112
    %v119 = vmul.f32 %v99, %v112
    %v120 = vmul.f32 %v100, %v112
    %v121 = vmul.f32 %v101, %v112
    %v122 = vmul.f32 %v102, %v112
    %v123 = vmul.f32 %v103, %v112
    %v124 = vmul.f32 %v104, %v112
    %v125 = vmul.f32 %v105, %v112
    %v126 = vmul.f32 %v106, %v112
    %v127 = vmul.f32 %v107, %v112
    %v128 = vmul.f32 %v108, %v112
    %v129 = vadd.f32 %v77, %v113
    %v130 = vadd.f32 %v78, %v114
    %v131 = vadd.f32 %v79, %v115
    %v132 = vadd.f32 %v80, %v116
    %v133 = vadd.f32 %v81, %v117
    %v134 = vadd.f32 %v82, %v118
    %v135 = vadd.f32 %v83, %v119
    %v136 = vadd.f32 %v84, %v120
    %v137 = vadd.f32 %v85, %v121
    %v138 = vadd.f32 %v86, %v122
    %v139 = vadd.f32 %v87, %v123
    %v140 = vadd.f32 %v88, %v124
    %v141 = vadd.f32 %v89, %v125
    %v142 = vadd.f32 %v90, %v126
    %v143 = vadd.f32 %v91, %v127
    %v144 = vadd.f32 %v92, %v128
    %s145 = scalar_lea.vmem [#allocation6], 128
    %v146 = vld [vmem:[%s145] sm:$0xff]
    %v147 = vld [vmem:[%s145 + $0x8] sm:$0xff]
    %v148 = vld [vmem:[%s145 + $0x10] sm:$0xff]
    %v149 = vld [vmem:[%s145 + $0x18] sm:$0xff]
    %v150 = vld [vmem:[%s145 + $0x20] sm:$0xff]
    %v151 = vld [vmem:[%s145 + $0x28] sm:$0xff]
    %v152 = vld [vmem:[%s145 + $0x30] sm:$0xff]
    %v153 = vld [vmem:[%s145 + $0x38] sm:$0xff]
    %v154 = vld [vmem:[%s145 + $0x40] sm:$0xff]
    %v155 = vld [vmem:[%s145 + $0x48] sm:$0xff]
    %v156 = vld [vmem:[%s145 + $0x50] sm:$0xff]
    %v157 = vld [vmem:[%s145 + $0x58] sm:$0xff]
    %v158 = vld [vmem:[%s145 + $0x60] sm:$0xff]
    %v159 = vld [vmem:[%s145 + $0x68] sm:$0xff]
    %v160 = vld [vmem:[%s145 + $0x70] sm:$0xff]
    %v161 = vld [vmem:[%s145 + $0x78] sm:$0xff]
    %v162 = vlaneseq
    %v163 = vshrl.u32 %v162, 7
    %v164 = vsub.s32 1, %v163
    %v165 = vrot.slane %v76, %v164
    %v166 = vmul.f32 %v146, %v165
    %v167 = vmul.f32 %v147, %v165
    %v168 = vmul.f32 %v148, %v165
    %v169 = vmul.f32 %v149, %v165
    %v170 = vmul.f32 %v150, %v165
    %v171 = vmul.f32 %v151, %v165
    %v172 = vmul.f32 %v152, %v165
    %v173 = vmul.f32 %v153, %v165
    %v174 = vmul.f32 %v154, %v165
    %v175 = vmul.f32 %v155, %v165
    %v176 = vmul.f32 %v156, %v165
    %v177 = vmul.f32 %v157, %v165
    %v178 = vmul.f32 %v158, %v165
    %v179 = vmul.f32 %v159, %v165
    %v180 = vmul.f32 %v160, %v165
    %v181 = vmul.f32 %v161, %v165
    %v182 = vadd.f32 %v129, %v166
    %v183 = vadd.f32 %v130, %v167
    %v184 = vadd.f32 %v131, %v168
    %v185 = vadd.f32 %v132, %v169
    %v186 = vadd.f32 %v133, %v170
    %v187 = vadd.f32 %v134, %v171
    %v188 = vadd.f32 %v135, %v172
    %v189 = vadd.f32 %v136, %v173
    %v190 = vadd.f32 %v137, %v174
    %v191 = vadd.f32 %v138, %v175
    %v192 = vadd.f32 %v139, %v176
    %v193 = vadd.f32 %v140, %v177
    %v194 = vadd.f32 %v141, %v178
    %v195 = vadd.f32 %v142, %v179
    %v196 = vadd.f32 %v143, %v180
    %v197 = vadd.f32 %v144, %v181
    %s198 = scalar_lea.vmem [#allocation6], 256
    %v199 = vld [vmem:[%s198] sm:$0xff]
    %v200 = vld [vmem:[%s198 + $0x8] sm:$0xff]
    %v201 = vld [vmem:[%s198 + $0x10] sm:$0xff]
    %v202 = vld [vmem:[%s198 + $0x18] sm:$0xff]
    %v203 = vld [vmem:[%s198 + $0x20] sm:$0xff]
    %v204 = vld [vmem:[%s198 + $0x28] sm:$0xff]
    %v205 = vld [vmem:[%s198 + $0x30] sm:$0xff]
    %v206 = vld [vmem:[%s198 + $0x38] sm:$0xff]
    %v207 = vld [vmem:[%s198 + $0x40] sm:$0xff]
    %v208 = vld [vmem:[%s198 + $0x48] sm:$0xff]
    %v209 = vld [vmem:[%s198 + $0x50] sm:$0xff]
    %v210 = vld [vmem:[%s198 + $0x58] sm:$0xff]
    %v211 = vld [vmem:[%s198 + $0x60] sm:$0xff]
    %v212 = vld [vmem:[%s198 + $0x68] sm:$0xff]
    %v213 = vld [vmem:[%s198 + $0x70] sm:$0xff]
    %v214 = vld [vmem:[%s198 + $0x78] sm:$0xff]
    %v215 = vlaneseq
    %v216 = vshrl.u32 %v215, 7
    %v217 = vsub.s32 2, %v216
    %v218 = vrot.slane %v76, %v217
    %v219 = vmul.f32 %v199, %v218
    %v220 = vmul.f32 %v200, %v218
    %v221 = vmul.f32 %v201, %v218
    %v222 = vmul.f32 %v202, %v218
    %v223 = vmul.f32 %v203, %v218
    %v224 = vmul.f32 %v204, %v218
    %v225 = vmul.f32 %v205, %v218
    %v226 = vmul.f32 %v206, %v218
    %v227 = vmul.f32 %v207, %v218
    %v228 = vmul.f32 %v208, %v218
    %v229 = vmul.f32 %v209, %v218
    %v230 = vmul.f32 %v210, %v218
    %v231 = vmul.f32 %v211, %v218
    %v232 = vmul.f32 %v212, %v218
    %v233 = vmul.f32 %v213, %v218
    %v234 = vmul.f32 %v214, %v218
    %v235 = vadd.f32 %v182, %v219
    %v236 = vadd.f32 %v183, %v220
    %v237 = vadd.f32 %v184, %v221
    %v238 = vadd.f32 %v185, %v222
    %v239 = vadd.f32 %v186, %v223
    %v240 = vadd.f32 %v187, %v224
    %v241 = vadd.f32 %v188, %v225
    %v242 = vadd.f32 %v189, %v226
    %v243 = vadd.f32 %v190, %v227
    %v244 = vadd.f32 %v191, %v228
    %v245 = vadd.f32 %v192, %v229
    %v246 = vadd.f32 %v193, %v230
    %v247 = vadd.f32 %v194, %v231
    %v248 = vadd.f32 %v195, %v232
    %v249 = vadd.f32 %v196, %v233
    %v250 = vadd.f32 %v197, %v234
    %s251 = scalar_lea.vmem [#allocation6], 384
    %v252 = vld [vmem:[%s251] sm:$0xff]
    %v253 = vld [vmem:[%s251 + $0x8] sm:$0xff]
    %v254 = vld [vmem:[%s251 + $0x10] sm:$0xff]
    %v255 = vld [vmem:[%s251 + $0x18] sm:$0xff]
    %v256 = vld [vmem:[%s251 + $0x20] sm:$0xff]
    %v257 = vld [vmem:[%s251 + $0x28] sm:$0xff]
    %v258 = vld [vmem:[%s251 + $0x30] sm:$0xff]
    %v259 = vld [vmem:[%s251 + $0x38] sm:$0xff]
    %v260 = vld [vmem:[%s251 + $0x40] sm:$0xff]
    %v261 = vld [vmem:[%s251 + $0x48] sm:$0xff]
    %v262 = vld [vmem:[%s251 + $0x50] sm:$0xff]
    %v263 = vld [vmem:[%s251 + $0x58] sm:$0xff]
    %v264 = vld [vmem:[%s251 + $0x60] sm:$0xff]
    %v265 = vld [vmem:[%s251 + $0x68] sm:$0xff]
    %v266 = vld [vmem:[%s251 + $0x70] sm:$0xff]
    %v267 = vld [vmem:[%s251 + $0x78] sm:$0xff]
    %v268 = vlaneseq
    %v269 = vshrl.u32 %v268, 7
    %v270 = vsub.s32 3, %v269
    %v271 = vrot.slane %v76, %v270
    %v272 = vmul.f32 %v252, %v271
    %v273 = vmul.f32 %v253, %v271
    %v274 = vmul.f32 %v254, %v271
    %v275 = vmul.f32 %v255, %v271
    %v276 = vmul.f32 %v256, %v271
    %v277 = vmul.f32 %v257, %v271
    %v278 = vmul.f32 %v258, %v271
    %v279 = vmul.f32 %v259, %v271
    %v280 = vmul.f32 %v260, %v271
    %v281 = vmul.f32 %v261, %v271
    %v282 = vmul.f32 %v262, %v271
    %v283 = vmul.f32 %v263, %v271
    %v284 = vmul.f32 %v264, %v271
    %v285 = vmul.f32 %v265, %v271
    %v286 = vmul.f32 %v266, %v271
    %v287 = vmul.f32 %v267, %v271
    %v288 = vadd.f32 %v235, %v272
    %v289 = vadd.f32 %v236, %v273
    %v290 = vadd.f32 %v237, %v274
    %v291 = vadd.f32 %v238, %v275
    %v292 = vadd.f32 %v239, %v276
    %v293 = vadd.f32 %v240, %v277
    %v294 = vadd.f32 %v241, %v278
    %v295 = vadd.f32 %v242, %v279
    %v296 = vadd.f32 %v243, %v280
    %v297 = vadd.f32 %v244, %v281
    %v298 = vadd.f32 %v245, %v282
    %v299 = vadd.f32 %v246, %v283
    %v300 = vadd.f32 %v247, %v284
    %v301 = vadd.f32 %v248, %v285
    %v302 = vadd.f32 %v249, %v286
    %v303 = vadd.f32 %v250, %v287
    %v304 = vmax.f32 %v288, 0.0
    %v305 = vmax.f32 %v289, 0.0
    %v306 = vmax.f32 %v290, 0.0
    %v307 = vmax.f32 %v291, 0.0
    %v308 = vmax.f32 %v292, 0.0
    %v309 = vmax.f32 %v293, 0.0
    %v310 = vmax.f32 %v294, 0.0
    %v311 = vmax.f32 %v295, 0.0
    %v312 = vmax.f32 %v296, 0.0
    %v313 = vmax.f32 %v297, 0.0
    %v314 = vmax.f32 %v298, 0.0
    %v315 = vmax.f32 %v299, 0.0
    %v316 = vmax.f32 %v300, 0.0
    %v317 = vmax.f32 %v301, 0.0
    %v318 = vmax.f32 %v302, 0.0
    %v319 = vmax.f32 %v303, 0.0
    %v320 = vld [vmem:[#allocation9] sm:$0xff]
    %v321 = vld [vmem:[#allocation9 + $0x8] sm:$0xff]
    %v322 = vld [vmem:[#allocation9 + $0x10] sm:$0xff]
    %v323 = vld [vmem:[#allocation9 + $0x18] sm:$0xff]
    %v324 = vld [vmem:[#allocation9 + $0x20] sm:$0xff]
    %v325 = vld [vmem:[#allocation9 + $0x28] sm:$0xff]
    %v326 = vld [vmem:[#allocation9 + $0x30] sm:$0xff]
    %v327 = vld [vmem:[#allocation9 + $0x38] sm:$0xff]
    %v328 = vld [vmem:[#allocation9 + $0x40] sm:$0xff]
    %v329 = vld [vmem:[#allocation9 + $0x48] sm:$0xff]
    %v330 = vld [vmem:[#allocation9 + $0x50] sm:$0xff]
    %v331 = vld [vmem:[#allocation9 + $0x58] sm:$0xff]
    %v332 = vld [vmem:[#allocation9 + $0x60] sm:$0xff]
    %v333 = vld [vmem:[#allocation9 + $0x68] sm:$0xff]
    %v334 = vld [vmem:[#allocation9 + $0x70] sm:$0xff]
    %v335 = vld [vmem:[#allocation9 + $0x78] sm:$0xff]
    %v336 = vmul.f32 %v304, %v320
    %v337 = vmul.f32 %v305, %v321
    %v338 = vmul.f32 %v306, %v322
    %v339 = vmul.f32 %v307, %v323
    %v340 = vmul.f32 %v308, %v324
    %v341 = vmul.f32 %v309, %v325
    %v342 = vmul.f32 %v310, %v326
    %v343 = vmul.f32 %v311, %v327
    %v344 = vmul.f32 %v312, %v328
    %v345 = vmul.f32 %v313, %v329
    %v346 = vmul.f32 %v314, %v330
    %v347 = vmul.f32 %v315, %v331
    %v348 = vmul.f32 %v316, %v332
    %v349 = vmul.f32 %v317, %v333
    %v350 = vmul.f32 %v318, %v334
    %v351 = vmul.f32 %v319, %v335
    %v352 = vadd.f32 %v336, %v337
    %v353 = vadd.f32 %v352, %v338
    %v354 = vadd.f32 %v353, %v339
    %v355 = vadd.f32 %v354, %v340
    %v356 = vadd.f32 %v355, %v341
    %v357 = vadd.f32 %v356, %v342
    %v358 = vadd.f32 %v357, %v343
    %v359 = vadd.f32 %v358, %v344
    %v360 = vadd.f32 %v359, %v345
    %v361 = vadd.f32 %v360, %v346
    %v362 = vadd.f32 %v361, %v347
    %v363 = vadd.f32 %v362, %v348
    %v364 = vadd.f32 %v363, %v349
    %v365 = vadd.f32 %v364, %v350
    %v366 = vadd.f32 %v365, %v351
    %v367 = vrot.slane %v366, 4
    %v368 = vadd.f32 %v366, %v367
    %v369 = vrot.slane %v368, 2
    %v370 = vadd.f32 %v368, %v369
    %v371 = vrot.slane %v370, 1
    %v372 = vadd.f32 %v370, %v371
    %v373 = vstv %s75
    %v374 = vadd.f32 %v372, %v373
    %375 = vst [vmem:[#allocation11] sm:$0x1] %v374
    // Predicated region
    $region38: #{tpu_custom_call.1} parent=1 // pred_check
      _
    $region39: #{tpu_custom_call.1} parent=1 // pred_check_branch
      %377 = sbr.rel (0) target = $region41
    $region40: #{tpu_custom_call.1} parent=1 // pred_region
      %s379 = ssub.s32 16, 16
      %380 = vsyncadd [#allocation5], %s379
      %s382 = sshll.u32 [#allocation11], 4
      %s383 = int_to_ptr.vmem [resolvable:$true] %s382
      %385 = dma.vmem_to_hbm [thread:$0]  %s383, 16, %s5, [#allocation5]
    $region41: #{tpu_custom_call.1} parent=1 // pred_fallthru
      _
    // Predicated region
    $region42: #{tpu_custom_call.1} parent=1 // pred_check
      _
    $region43: #{tpu_custom_call.1} parent=1 // pred_check_branch
      %387 = sbr.rel (0) target = $region45
    $region44: #{tpu_custom_call.1} parent=1 // pred_region
      %388 = dma.done [#allocation5], 16
    $region45: #{tpu_custom_call.1} parent=1 // pred_fallthru
      _
    %389 = vsyncpa [#allocation4], 1
    %390 = vsyncpa [#allocation7], 1
    %391 = vsyncpa [#allocation10], 1
    %392 = vsyncpa [#allocation5], 1

</llo_original>
